<compile_context>
chip_gen: v6e
topology: v6e:2x2x1
jax: 0.10.0
libtpu: 0.0.40
codegen_flags: <defaults>
</compile_context>

<pallas_src>
import math

import jax
import jax.numpy as jnp
from jax import lax
from jax.experimental import pallas as pl
from jax.experimental.pallas import tpu as pltpu


# ----------------------------- configuration --------------------------------
INPUT_DIM = 16
OUTPUT_DIM = 8
HIDDEN_DIMS = (32,)            # attention_dim = hidden_dims[-1] = 32
N_ATTENTIONS = 2
ATTN_DIM = HIDDEN_DIMS[-1]
SEQ = 8                        # number of examples per "task" set
BATCH = 16                     # number of tasks evaluated in one call
PARAMS_PER_BLOCK = 8           # wq,bq,wk,bk,wv,bv,wf,bf (natural/reference layout)

# ------------------------ packed parameter slab layout ----------------------
# Single (TOTAL_ROWS, 128) f32 buffer; every parameter starts at an
# 8-sublane-aligned row, columns 0:cols (rest zero-padded).
LANES = 128
W0_ROW = 0                                   # (16, 32)
B0_ROW = 16                                  # (1, 32)  (padded to 8 rows)
BLOCK_ROW = 24                               # first attention block
QKV_W_OFF = 0                                # (32, 96) fused wq|wk|wv
QKV_B_OFF = 32                               # (1, 96)
FF_W_OFF = 40                                # (32, 32)
FF_B_OFF = 72                                # (1, 32)
BLOCK_STRIDE = 80
OUT_W_ROW = BLOCK_ROW + N_ATTENTIONS * BLOCK_STRIDE   # (32, 8)
OUT_B_ROW = OUT_W_ROW + 32                            # (1, 8)
TOTAL_ROWS = OUT_B_ROW + 8                            # 224 rows -> ~112 KiB


# ------------------------------- kernel -------------------------------------
def task_label_kernel(x_ref, p_ref, out_ref):
    """One task per grid step: x_ref (1, S, D_in); p_ref = packed param slab."""
    x = x_ref[0]                                             # (S, D_in)

    # --- network[0]: Linear(input_dim, attention_dim) + ReLU ------------------
    w0 = p_ref[W0_ROW:W0_ROW + INPUT_DIM, 0:ATTN_DIM]        # (16, 32)
    b0 = p_ref[B0_ROW:B0_ROW + 1, 0:ATTN_DIM]                # (1, 32)
    h = jnp.maximum(
        jnp.dot(x, w0, preferred_element_type=jnp.float32) + b0, 0.0
    )                                                        # (S, 32)

    # --- network[2:]: n_attentions SelfAttentionBlocks ------------------------
    for i in range(N_ATTENTIONS):
        base = BLOCK_ROW + i * BLOCK_STRIDE
        wqkv = p_ref[base + QKV_W_OFF:base + QKV_W_OFF + ATTN_DIM, 0:3 * ATTN_DIM]
        bqkv = p_ref[base + QKV_B_OFF:base + QKV_B_OFF + 1, 0:3 * ATTN_DIM]
        wf = p_ref[base + FF_W_OFF:base + FF_W_OFF + ATTN_DIM, 0:ATTN_DIM]
        bf = p_ref[base + FF_B_OFF:base + FF_B_OFF + 1, 0:ATTN_DIM]

        # Fused Q/K/V projection: one (S,32)x(32,96) MXU pass.
        qkv = jnp.dot(h, wqkv, preferred_element_type=jnp.float32) + bqkv
        q = qkv[:, 0:ATTN_DIM]                    # already scaled by 1/sqrt(A)
        k = qkv[:, ATTN_DIM:2 * ATTN_DIM]
        v = qkv[:, 2 * ATTN_DIM:3 * ATTN_DIM]

        # scores = q @ k.T without materializing a transpose.
        scores = lax.dot_general(
            q, k,
            dimension_numbers=(((1,), (1,)), ((), ())),
            preferred_element_type=jnp.float32,
        )                                                    # (S, S)
        scores = scores - jnp.max(scores, axis=-1, keepdims=True)
        p = jnp.exp(scores)
        denom = jnp.sum(p, axis=-1, keepdims=True)
        p = p * pl.reciprocal(denom, approx=False)           # exact: keep 1e-4 tol

        attn_out = jnp.dot(p, v, preferred_element_type=jnp.float32)   # (S, 32)
        ff = jnp.maximum(
            jnp.dot(attn_out, wf, preferred_element_type=jnp.float32) + bf, 0.0
        )
        h = h + ff                                           # residual connection

    # --- final ReLU + output_layer ---------------------------------------------
    h = jnp.maximum(h, 0.0)
    wout = p_ref[OUT_W_ROW:OUT_W_ROW + ATTN_DIM, 0:OUTPUT_DIM]
    bout = p_ref[OUT_B_ROW:OUT_B_ROW + 1, 0:OUTPUT_DIM]
    out_ref[0] = jnp.dot(h, wout, preferred_element_type=jnp.float32) + bout


# ------------------------------- wrapper -------------------------------------
def task_label_generator(x, packed_params):
    """x: (B, S, INPUT_DIM); packed_params: (TOTAL_ROWS, 128) slab."""
    B, S, _ = x.shape
    return pl.pallas_call(
        task_label_kernel,
        out_shape=jax.ShapeDtypeStruct((B, S, OUTPUT_DIM), jnp.float32),
        grid_spec=pltpu.PrefetchScalarGridSpec(
            num_scalar_prefetch=0,
            grid=(B,),
            in_specs=[
                pl.BlockSpec((1, S, INPUT_DIM), lambda b: (b, 0, 0)),
                # Constant index_map: weight slab DMA'd once, VMEM-resident.
                pl.BlockSpec((TOTAL_ROWS, LANES), lambda b: (0, 0)),
            ],
            out_specs=pl.BlockSpec((1, S, OUTPUT_DIM), lambda b: (b, 0, 0)),
        ),
        compiler_params=pltpu.CompilerParams(
            dimension_semantics=("parallel",),   # shards tasks across TCs on v7x
        ),
    )(x, packed_params)


# --------------------------- parameter creation -------------------------------
def make_params(key):
    """Natural (reference) layout: [w0, b0, (wq,bq,wk,bk,wv,bv,wf,bf)*N, wout, bout]."""

    def linear_params(key, d_in, d_out):
        kw, kb = jax.random.split(key)
        bound = 1.0 / math.sqrt(d_in)             # PyTorch-like uniform init
        w = jax.random.uniform(kw, (d_in, d_out), jnp.float32, -bound, bound)
        b = jax.random.uniform(kb, (1, d_out), jnp.float32, -bound, bound)
        return w, b

    keys = jax.random.split(key, 2 + 4 * N_ATTENTIONS)
    params = []
    w0, b0 = linear_params(keys[0], INPUT_DIM, ATTN_DIM)
    params += [w0, b0]
    kidx = 1
    for _ in range(N_ATTENTIONS):
        for _ in range(3):                         # q, k, v projections
            w, b = linear_params(keys[kidx], ATTN_DIM, ATTN_DIM)
            params += [w, b]
            kidx += 1
        wf, bf = linear_params(keys[kidx], ATTN_DIM, HIDDEN_DIMS[-1])
        params += [wf, bf]
        kidx += 1
    wout, bout = linear_params(keys[kidx], ATTN_DIM, OUTPUT_DIM)
    params += [wout, bout]
    return params


def pack_params(params):
    """Pack all params into one (TOTAL_ROWS, 128) slab; fold 1/sqrt(A) into wq/bq
    and fuse wq|wk|wv (and biases) column-wise for the single QKV matmul."""
    scale = 1.0 / math.sqrt(ATTN_DIM)
    slab = jnp.zeros((TOTAL_ROWS, LANES), jnp.float32)

    w0, b0 = params[0], params[1]
    slab = slab.at[W0_ROW:W0_ROW + INPUT_DIM, 0:ATTN_DIM].set(w0)
    slab = slab.at[B0_ROW:B0_ROW + 1, 0:ATTN_DIM].set(b0)

    off = 2
    for i in range(N_ATTENTIONS):
        wq, bq, wk, bk, wv, bv, wf, bf = params[off:off + PARAMS_PER_BLOCK]
        off += PARAMS_PER_BLOCK
        wqkv = jnp.concatenate([wq * scale, wk, wv], axis=1)   # (32, 96)
        bqkv = jnp.concatenate([bq * scale, bk, bv], axis=1)   # (1, 96)
        base = BLOCK_ROW + i * BLOCK_STRIDE
        slab = slab.at[base + QKV_W_OFF:base + QKV_W_OFF + ATTN_DIM, 0:3 * ATTN_DIM].set(wqkv)
        slab = slab.at[base + QKV_B_OFF:base + QKV_B_OFF + 1, 0:3 * ATTN_DIM].set(bqkv)
        slab = slab.at[base + FF_W_OFF:base + FF_W_OFF + ATTN_DIM, 0:ATTN_DIM].set(wf)
        slab = slab.at[base + FF_B_OFF:base + FF_B_OFF + 1, 0:ATTN_DIM].set(bf)

    wout, bout = params[off], params[off + 1]
    slab = slab.at[OUT_W_ROW:OUT_W_ROW + ATTN_DIM, 0:OUTPUT_DIM].set(wout)
    slab = slab.at[OUT_B_ROW:OUT_B_ROW + 1, 0:OUTPUT_DIM].set(bout)
    return slab


# --------------------------- pure-JAX reference -------------------------------
def reference(x, params):
    """x: (B, S, INPUT_DIM); params in natural layout."""
    w0, b0 = params[0], params[1]
    h = jnp.maximum(x @ w0 + b0, 0.0)
    off = 2
    for _ in range(N_ATTENTIONS):
        wq, bq, wk, bk, wv, bv, wf, bf = params[off:off + PARAMS_PER_BLOCK]
        off += PARAMS_PER_BLOCK
        q, k, v = h @ wq + bq, h @ wk + bk, h @ wv + bv
        s = jnp.einsum("bqa,bka->bqk", q, k) / math.sqrt(ATTN_DIM)
        p = jax.nn.softmax(s, axis=-1)
        att = jnp.einsum("bqk,bka->bqa", p, v)
        h = h + jnp.maximum(att @ wf + bf, 0.0)
    h = jnp.maximum(h, 0.0)
    wout, bout = params[off], params[off + 1]
    return h @ wout + bout


# ----------------------------------- main -------------------------------------
if __name__ == "__main__":
    key = jax.random.PRNGKey(0)
    kx, kp = jax.random.split(key)
    x = jax.random.normal(kx, (BATCH, SEQ, INPUT_DIM), jnp.float32)
    params = make_params(kp)
    slab = pack_params(params)

    out = task_label_generator(x, slab)
    out = jax.block_until_ready(out)

    ref = reference(x, params)
    assert out.shape == (BATCH, SEQ, OUTPUT_DIM)
    assert jnp.allclose(out, ref, atol=1e-4, rtol=1e-4)
    print("KERNEL_OK")
</pallas_src>

<mosaic_0001>
module attributes {stable_mosaic.version = 11 : i64} {
  func.func @task_label_kernel(%arg0: i32, %arg1: memref<1x8x16xf32, #tpu.memory_space<vmem>>, %arg2: memref<224x128xf32, #tpu.memory_space<vmem>>, %arg3: memref<1x8x8xf32, #tpu.memory_space<vmem>>) attributes {dimension_semantics = [#tpu.dimension_semantics<parallel>], iteration_bounds = array<i64: 16>, scalar_prefetch = 0 : i64, scratch_operands = 0 : i64, tpu.core_type = #tpu.core_type<tc>, window_params = [{transform_indices = @transform_0, window_bounds = array<i64: 1, 8, 16>}, {pipeline_mode = #tpu.pipeline_mode<synchronous>, transform_indices = @transform_1, window_bounds = array<i64: 224, 128>}, {transform_indices = @transform_2, window_bounds = array<i64: 1, 8, 8>}]} {
    %c0 = arith.constant 0 : index
    %c0_0 = arith.constant 0 : index
    %c0_1 = arith.constant 0 : index
    %0 = vector.load %arg1[%c0, %c0_0, %c0_1] : memref<1x8x16xf32, #tpu.memory_space<vmem>>, vector<1x8x16xf32>
    %1 = vector.shape_cast %0 : vector<1x8x16xf32> to vector<8x16xf32>
    %c0_2 = arith.constant 0 : index
    %c0_3 = arith.constant 0 : index
    %2 = vector.load %arg2[%c0_2, %c0_3] : memref<224x128xf32, #tpu.memory_space<vmem>>, vector<16x32xf32>
    %c16 = arith.constant 16 : index
    %c0_4 = arith.constant 0 : index
    %3 = vector.load %arg2[%c16, %c0_4] : memref<224x128xf32, #tpu.memory_space<vmem>>, vector<1x32xf32>
    %cst = arith.constant dense<0.000000e+00> : vector<8x32xf32>
    %4 = tpu.matmul %1, %2, %cst {dimension_numbers = #tpu.dot_dimension_numbers<[1], [0], [0], [1], [0, 0, 1, 1], [], []>} : vector<8x16xf32>, vector<16x32xf32>, vector<8x32xf32> -> vector<8x32xf32>
    %5 = vector.broadcast %3 : vector<1x32xf32> to vector<8x32xf32>
    %6 = arith.addf %4, %5 : vector<8x32xf32>
    %cst_5 = arith.constant 0.000000e+00 : f32
    %7 = vector.broadcast %cst_5 : f32 to vector<8x32xf32>
    %8 = arith.maximumf %6, %7 : vector<8x32xf32>
    %c24 = arith.constant 24 : index
    %c0_6 = arith.constant 0 : index
    %9 = vector.load %arg2[%c24, %c0_6] : memref<224x128xf32, #tpu.memory_space<vmem>>, vector<32x96xf32>
    %c56 = arith.constant 56 : index
    %c0_7 = arith.constant 0 : index
    %10 = vector.load %arg2[%c56, %c0_7] : memref<224x128xf32, #tpu.memory_space<vmem>>, vector<1x96xf32>
    %c64 = arith.constant 64 : index
    %c0_8 = arith.constant 0 : index
    %11 = vector.load %arg2[%c64, %c0_8] : memref<224x128xf32, #tpu.memory_space<vmem>>, vector<32x32xf32>
    %c96 = arith.constant 96 : index
    %c0_9 = arith.constant 0 : index
    %12 = vector.load %arg2[%c96, %c0_9] : memref<224x128xf32, #tpu.memory_space<vmem>>, vector<1x32xf32>
    %cst_10 = arith.constant dense<0.000000e+00> : vector<8x96xf32>
    %13 = tpu.matmul %8, %9, %cst_10 {dimension_numbers = #tpu.dot_dimension_numbers<[1], [0], [0], [1], [0, 0, 1, 1], [], []>} : vector<8x32xf32>, vector<32x96xf32>, vector<8x96xf32> -> vector<8x96xf32>
    %14 = vector.broadcast %10 : vector<1x96xf32> to vector<8x96xf32>
    %15 = arith.addf %13, %14 : vector<8x96xf32>
    %16 = vector.extract_strided_slice %15 {offsets = [0, 0], sizes = [8, 32], strides = [1, 1]} : vector<8x96xf32> to vector<8x32xf32>
    %17 = vector.extract_strided_slice %15 {offsets = [0, 32], sizes = [8, 32], strides = [1, 1]} : vector<8x96xf32> to vector<8x32xf32>
    %18 = vector.extract_strided_slice %15 {offsets = [0, 64], sizes = [8, 32], strides = [1, 1]} : vector<8x96xf32> to vector<8x32xf32>
    %cst_11 = arith.constant dense<0.000000e+00> : vector<8x8xf32>
    %19 = tpu.matmul %16, %17, %cst_11 {dimension_numbers = #tpu.dot_dimension_numbers<[1], [1], [0], [0], [0, 0, 1, 0], [], []>} : vector<8x32xf32>, vector<8x32xf32>, vector<8x8xf32> -> vector<8x8xf32>
    %cst_12 = arith.constant dense<0xFF800000> : vector<8xf32>
    %20 = vector.multi_reduction <maximumf>, %19, %cst_12 [1] : vector<8x8xf32> to vector<8xf32>
    %21 = vector.shape_cast %20 : vector<8xf32> to vector<8x1xf32>
    %22 = vector.broadcast %21 : vector<8x1xf32> to vector<8x8xf32>
    %23 = arith.subf %19, %22 : vector<8x8xf32>
    %24 = math.exp %23 : vector<8x8xf32>
    %cst_13 = arith.constant dense<0.000000e+00> : vector<8xf32>
    %25 = vector.multi_reduction <add>, %24, %cst_13 [1] : vector<8x8xf32> to vector<8xf32>
    %26 = vector.shape_cast %25 : vector<8xf32> to vector<8x1xf32>
    %27 = tpu.reciprocal %26 : vector<8x1xf32> -> vector<8x1xf32>
    %28 = vector.broadcast %27 : vector<8x1xf32> to vector<8x8xf32>
    %29 = arith.mulf %24, %28 : vector<8x8xf32>
    %cst_14 = arith.constant dense<0.000000e+00> : vector<8x32xf32>
    %30 = tpu.matmul %29, %18, %cst_14 {dimension_numbers = #tpu.dot_dimension_numbers<[1], [0], [0], [1], [0, 0, 1, 1], [], []>} : vector<8x8xf32>, vector<8x32xf32>, vector<8x32xf32> -> vector<8x32xf32>
    %cst_15 = arith.constant dense<0.000000e+00> : vector<8x32xf32>
    %31 = tpu.matmul %30, %11, %cst_15 {dimension_numbers = #tpu.dot_dimension_numbers<[1], [0], [0], [1], [0, 0, 1, 1], [], []>} : vector<8x32xf32>, vector<32x32xf32>, vector<8x32xf32> -> vector<8x32xf32>
    %32 = vector.broadcast %12 : vector<1x32xf32> to vector<8x32xf32>
    %33 = arith.addf %31, %32 : vector<8x32xf32>
    %cst_16 = arith.constant 0.000000e+00 : f32
    %34 = vector.broadcast %cst_16 : f32 to vector<8x32xf32>
    %35 = arith.maximumf %33, %34 : vector<8x32xf32>
    %36 = arith.addf %8, %35 : vector<8x32xf32>
    %c104 = arith.constant 104 : index
    %c0_17 = arith.constant 0 : index
    %37 = vector.load %arg2[%c104, %c0_17] : memref<224x128xf32, #tpu.memory_space<vmem>>, vector<32x96xf32>
    %c136 = arith.constant 136 : index
    %c0_18 = arith.constant 0 : index
    %38 = vector.load %arg2[%c136, %c0_18] : memref<224x128xf32, #tpu.memory_space<vmem>>, vector<1x96xf32>
    %c144 = arith.constant 144 : index
    %c0_19 = arith.constant 0 : index
    %39 = vector.load %arg2[%c144, %c0_19] : memref<224x128xf32, #tpu.memory_space<vmem>>, vector<32x32xf32>
    %c176 = arith.constant 176 : index
    %c0_20 = arith.constant 0 : index
    %40 = vector.load %arg2[%c176, %c0_20] : memref<224x128xf32, #tpu.memory_space<vmem>>, vector<1x32xf32>
    %cst_21 = arith.constant dense<0.000000e+00> : vector<8x96xf32>
    %41 = tpu.matmul %36, %37, %cst_21 {dimension_numbers = #tpu.dot_dimension_numbers<[1], [0], [0], [1], [0, 0, 1, 1], [], []>} : vector<8x32xf32>, vector<32x96xf32>, vector<8x96xf32> -> vector<8x96xf32>
    %42 = vector.broadcast %38 : vector<1x96xf32> to vector<8x96xf32>
    %43 = arith.addf %41, %42 : vector<8x96xf32>
    %44 = vector.extract_strided_slice %43 {offsets = [0, 0], sizes = [8, 32], strides = [1, 1]} : vector<8x96xf32> to vector<8x32xf32>
    %45 = vector.extract_strided_slice %43 {offsets = [0, 32], sizes = [8, 32], strides = [1, 1]} : vector<8x96xf32> to vector<8x32xf32>
    %46 = vector.extract_strided_slice %43 {offsets = [0, 64], sizes = [8, 32], strides = [1, 1]} : vector<8x96xf32> to vector<8x32xf32>
    %cst_22 = arith.constant dense<0.000000e+00> : vector<8x8xf32>
    %47 = tpu.matmul %44, %45, %cst_22 {dimension_numbers = #tpu.dot_dimension_numbers<[1], [1], [0], [0], [0, 0, 1, 0], [], []>} : vector<8x32xf32>, vector<8x32xf32>, vector<8x8xf32> -> vector<8x8xf32>
    %cst_23 = arith.constant dense<0xFF800000> : vector<8xf32>
    %48 = vector.multi_reduction <maximumf>, %47, %cst_23 [1] : vector<8x8xf32> to vector<8xf32>
    %49 = vector.shape_cast %48 : vector<8xf32> to vector<8x1xf32>
    %50 = vector.broadcast %49 : vector<8x1xf32> to vector<8x8xf32>
    %51 = arith.subf %47, %50 : vector<8x8xf32>
    %52 = math.exp %51 : vector<8x8xf32>
    %cst_24 = arith.constant dense<0.000000e+00> : vector<8xf32>
    %53 = vector.multi_reduction <add>, %52, %cst_24 [1] : vector<8x8xf32> to vector<8xf32>
    %54 = vector.shape_cast %53 : vector<8xf32> to vector<8x1xf32>
    %55 = tpu.reciprocal %54 : vector<8x1xf32> -> vector<8x1xf32>
    %56 = vector.broadcast %55 : vector<8x1xf32> to vector<8x8xf32>
    %57 = arith.mulf %52, %56 : vector<8x8xf32>
    %cst_25 = arith.constant dense<0.000000e+00> : vector<8x32xf32>
    %58 = tpu.matmul %57, %46, %cst_25 {dimension_numbers = #tpu.dot_dimension_numbers<[1], [0], [0], [1], [0, 0, 1, 1], [], []>} : vector<8x8xf32>, vector<8x32xf32>, vector<8x32xf32> -> vector<8x32xf32>
    %cst_26 = arith.constant dense<0.000000e+00> : vector<8x32xf32>
    %59 = tpu.matmul %58, %39, %cst_26 {dimension_numbers = #tpu.dot_dimension_numbers<[1], [0], [0], [1], [0, 0, 1, 1], [], []>} : vector<8x32xf32>, vector<32x32xf32>, vector<8x32xf32> -> vector<8x32xf32>
    %60 = vector.broadcast %40 : vector<1x32xf32> to vector<8x32xf32>
    %61 = arith.addf %59, %60 : vector<8x32xf32>
    %cst_27 = arith.constant 0.000000e+00 : f32
    %62 = vector.broadcast %cst_27 : f32 to vector<8x32xf32>
    %63 = arith.maximumf %61, %62 : vector<8x32xf32>
    %64 = arith.addf %36, %63 : vector<8x32xf32>
    %cst_28 = arith.constant 0.000000e+00 : f32
    %65 = vector.broadcast %cst_28 : f32 to vector<8x32xf32>
    %66 = arith.maximumf %64, %65 : vector<8x32xf32>
    %c184 = arith.constant 184 : index
    %c0_29 = arith.constant 0 : index
    %67 = vector.load %arg2[%c184, %c0_29] : memref<224x128xf32, #tpu.memory_space<vmem>>, vector<32x8xf32>
    %c216 = arith.constant 216 : index
    %c0_30 = arith.constant 0 : index
    %68 = vector.load %arg2[%c216, %c0_30] : memref<224x128xf32, #tpu.memory_space<vmem>>, vector<1x8xf32>
    %cst_31 = arith.constant dense<0.000000e+00> : vector<8x8xf32>
    %69 = tpu.matmul %66, %67, %cst_31 {dimension_numbers = #tpu.dot_dimension_numbers<[1], [0], [0], [1], [0, 0, 1, 1], [], []>} : vector<8x32xf32>, vector<32x8xf32>, vector<8x8xf32> -> vector<8x8xf32>
    %70 = vector.broadcast %68 : vector<1x8xf32> to vector<8x8xf32>
    %71 = arith.addf %69, %70 : vector<8x8xf32>
    %c0_32 = arith.constant 0 : index
    %c0_33 = arith.constant 0 : index
    %c0_34 = arith.constant 0 : index
    %72 = vector.load %arg3[%c0_32, %c0_33, %c0_34] : memref<1x8x8xf32, #tpu.memory_space<vmem>>, vector<1x8x8xf32>
    %73 = vector.shape_cast %72 : vector<1x8x8xf32> to vector<8x8xf32>
    %74 = vector.shape_cast %71 : vector<8x8xf32> to vector<1x8x8xf32>
    tpu.vector_store %arg3[%c0_32, %c0_33, %c0_34], %74 {strides = array<i32>} : memref<1x8x8xf32, #tpu.memory_space<vmem>>, vector<1x8x8xf32>,
    return
  }
  func.func @transform_0(%arg0: i32) -> (i32, i32, i32) {
    %c0_i32 = arith.constant 0 : i32
    %c0_i32_0 = arith.constant 0 : i32
    %c0_i32_1 = arith.constant 0 : i32
    return %arg0, %c0_i32, %c0_i32_0 : i32, i32, i32
  }
  func.func @transform_1(%arg0: i32) -> (i32, i32) {
    %c0_i32 = arith.constant 0 : i32
    %c0_i32_0 = arith.constant 0 : i32
    %c0_i32_1 = arith.constant 0 : i32
    return %c0_i32, %c0_i32_0 : i32, i32
  }
  func.func @transform_2(%arg0: i32) -> (i32, i32, i32) {
    %c0_i32 = arith.constant 0 : i32
    %c0_i32_0 = arith.constant 0 : i32
    %c0_i32_1 = arith.constant 0 : i32
    return %arg0, %c0_i32, %c0_i32_0 : i32, i32, i32
  }
}

</mosaic_0001>

<llo_original>
// kernel: tpu_custom_call.1
$region0: #{tpu_custom_call.1}
  #allocation0 [shape = 'u32[]', space=smem, size = 0x4, offset = 0x4, fixed_abs, tag = 'smem constant byte address 0x4 - core index']
  #allocation1 [shape = 'u32[144,128]{1,0:T(1,128)}', space=vmem, size = 0x12000, scoped, tag = 'internal scratch']
  %s0 = inlined_call_operand.hbm [shape: f32[16,8,16], index: 0, kind: input, shape index: {}]
  %s1 = inlined_call_operand.hbm [shape: f32[224,128], index: 1, kind: input, shape index: {}]
  %s2 = inlined_call_operand.vmem [shape: f32[16,8,8], index: 2, kind: output, shape index: {}]
  %s3 = sld [smem:[#allocation0]]
  $region49: #{tpu_custom_call.1} parent=0
    _
  %s5 = ssub.s32 1, %s3
  %s6 = scalar_select 0, %s5, %s3
  $region1: #{tpu_custom_call.1} parent=0
    #allocation2 [shape = 'u8[8192]{0}', space=vmem, size = 0x2000, scoped, tag = 'input window, operand 0']
    #allocation3 [shape = 's32[2]{0}', space=sflag, size = 0x8, scoped, tag = 'scoped memory for tpu_custom_call.1']
    #allocation4 [shape = 'u8[114688]{0}', space=vmem, size = 0x1c000, scoped, tag = 'input window, operand 1, single buffered']
    #allocation5 [shape = 's32[1]{0}', space=sflag, size = 0x4, scoped, tag = 'scoped memory for tpu_custom_call.1']
    %7 = vsyncpa [#allocation3], 0
    %s8 = scalar_lea.sflag [#allocation3], 1
    %9 = vsyncpa %s8, 0
    %10 = vsyncpa [#allocation5], 0
    loop: start=0, step=1, limit=18
    $region2: #{tpu_custom_call.1} parent=1 // loop_pre_header
      _
    $region3: #{tpu_custom_call.1} parent=1 // loop_header
      %s12 = sphi 0, %s16
      %p13 = scmp.ge.s32.totalorder %s12, 18
      %s22 = sphi 0, %s24
      %s25 = sphi 0, %s22
      %s26 = sphi 0, %s25
      %s42 = sphi 0, %s26
      %s46 = sphi 0, %s46
      %s48 = sphi 0, %s46
      %s49 = sphi 0, %s48
      %s63 = sphi 0, %s49
      %s69 = sphi 0, %s71
      %s72 = sphi 0, %s69
      %s73 = sphi 0, %s72
      %s89 = sphi 0, %s73
    $region4: #{tpu_custom_call.1} parent=1 // loop_header_branch
      %15 = sbr.rel (%p13) target = $region8
    $region5: #{tpu_custom_call.1} parent=1 // loop_body
      %s17 = ssub.s32 %s12, 1
      %s18 = ssub.s32 %s12, 2
      %s19 = sadd.s32 %s12, 1
      %s20 = ssub.s32 %s12, %s19
      %p21 = scmp.eq.s32.totalorder %s20, 0
      %s23 = sadd.s32 %s22, 1
      %s24 = scalar_select %p21, %s22, %s23
      %p27 = pneg %p21
      %p28 = scmp.eq.s32.totalorder %s12, 15
      %p29 = por %p27, %p28
      %p30 = scmp.ne.s32.totalorder %s22, %s25
      %p31 = scmp.eq.s32.totalorder %s12, 0
      %p32 = por %p30, %p31
      %p33 = scmp.ne.s32.totalorder %s22, %s25
      %p34 = scmp.eq.s32.totalorder %s17, 15
      %p35 = por %p33, %p34
      %p36 = scmp.ne.s32.totalorder %s25, %s26
      %p37 = scmp.eq.s32.totalorder %s17, 0
      %p38 = por %p36, %p37
      %p39 = scmp.ne.s32.totalorder %s25, %s26
      %p40 = scmp.eq.s32.totalorder %s18, 15
      %p41 = por %p39, %p40
      %p43 = scmp.ne.s32.totalorder %s26, %s42
      %p44 = scmp.eq.s32.totalorder %s18, 0
      %p45 = por %p43, %p44
      %s47 = sadd.s32 %s46, 1
      %p50 = scmp.eq.s32.totalorder %s12, 15
      %p51 = scmp.ne.s32.totalorder %s46, %s48
      %p52 = scmp.eq.s32.totalorder %s12, 0
      %p53 = por %p51, %p52
      %p54 = scmp.ne.s32.totalorder %s46, %s48
      %p55 = scmp.eq.s32.totalorder %s17, 15
      %p56 = por %p54, %p55
      %p57 = scmp.ne.s32.totalorder %s48, %s49
      %p58 = scmp.eq.s32.totalorder %s17, 0
      %p59 = por %p57, %p58
      %p60 = scmp.ne.s32.totalorder %s48, %s49
      %p61 = scmp.eq.s32.totalorder %s18, 15
      %p62 = por %p60, %p61
      %p64 = scmp.ne.s32.totalorder %s49, %s63
      %p65 = scmp.eq.s32.totalorder %s18, 0
      %p66 = por %p64, %p65
      %s67 = ssub.s32 %s12, %s19
      %p68 = scmp.eq.s32.totalorder %s67, 0
      %s70 = sadd.s32 %s69, 1
      %s71 = scalar_select %p68, %s69, %s70
      %p74 = pneg %p68
      %p75 = scmp.eq.s32.totalorder %s12, 15
      %p76 = por %p74, %p75
      %p77 = scmp.ne.s32.totalorder %s69, %s72
      %p78 = scmp.eq.s32.totalorder %s12, 0
      %p79 = por %p77, %p78
      %p80 = scmp.ne.s32.totalorder %s69, %s72
      %p81 = scmp.eq.s32.totalorder %s17, 15
      %p82 = por %p80, %p81
      %p83 = scmp.ne.s32.totalorder %s72, %s73
      %p84 = scmp.eq.s32.totalorder %s17, 0
      %p85 = por %p83, %p84
      %p86 = scmp.ne.s32.totalorder %s72, %s73
      %p87 = scmp.eq.s32.totalorder %s18, 15
      %p88 = por %p86, %p87
      %p90 = scmp.ne.s32.totalorder %s73, %s89
      %p91 = scmp.eq.s32.totalorder %s18, 0
      %p92 = por %p90, %p91
      %p93 = scmp.le.s32.totalorder 1, %s12
      %p94 = scmp.lt.s32.totalorder %s12, 17
      %p95 = pnand %p93, %p94
      %p96 = pneg %p95
      // Predicated region
      $region9: #{tpu_custom_call.1} parent=5 // pred_check
        _
      $region10: #{tpu_custom_call.1} parent=5 // pred_check_branch
        %98 = sbr.rel (%p95) target = $region12
      $region11: #{tpu_custom_call.1} parent=5 // pred_region
        %s99 = ssub.s32 %s12, 1
        // Predicated region
        $region13: #{tpu_custom_call.1} parent=11 // pred_check
          %p100 = pneg %p59
        $region14: #{tpu_custom_call.1} parent=11 // pred_check_branch
          %102 = sbr.rel (%p100) target = $region16
        $region15: #{tpu_custom_call.1} parent=11 // pred_region
          %s104 = ssub.s32 3584, 3584
          %105 = vsyncadd [#allocation5], %s104
          %s106 = sshll.u32 [#allocation4], 4
          %s107 = int_to_ptr.vmem [resolvable:$true] %s106
          %112 = dma.hbm_to_vmem [thread:$0]  %s1, 3584, %s107, [#allocation5], 128, 128, 8
        $region16: #{tpu_custom_call.1} parent=11 // pred_fallthru
          _
      $region12: #{tpu_custom_call.1} parent=5 // pred_fallthru
        _
      %p113 = scmp.lt.s32.totalorder %s12, 16
      // Predicated region
      $region17: #{tpu_custom_call.1} parent=5 // pred_check
        %p114 = pneg %p113
      $region18: #{tpu_custom_call.1} parent=5 // pred_check_branch
        %116 = sbr.rel (%p114) target = $region20
      $region19: #{tpu_custom_call.1} parent=5 // pred_region
        // Predicated region
        $region21: #{tpu_custom_call.1} parent=19 // pred_check
          %p117 = pneg %p32
        $region22: #{tpu_custom_call.1} parent=19 // pred_check_branch
          %119 = sbr.rel (%p117) target = $region24
        $region23: #{tpu_custom_call.1} parent=19 // pred_region
          %s120 = sand.u32 %s22, 1
          %s121 = scalar_lea.sflag [#allocation3], %s120
          %s122 = sand.u32 %s22, 1
          %s123 = smul.addr %s122, 8
          %s124 = scalar_lea.vmem [#allocation2], %s123
          %s126 = ssub.s32 128, 128
          %127 = vsyncadd %s121, %s126
          %s128 = smul.addr %s12, 128
          %s129 = scalar_lea.hbm %s0, %s128
          %s131 = sshll.u32 %s124, 4
          %s132 = int_to_ptr.vmem [resolvable:$true] %s131
          %134 = dma.hbm_to_vmem [thread:$0]  %s129, 128, %s132, %s121
        $region24: #{tpu_custom_call.1} parent=19 // pred_fallthru
          _
      $region20: #{tpu_custom_call.1} parent=5 // pred_fallthru
        _
      %p135 = scmp.le.s32.totalorder 1, %s12
      %p136 = scmp.lt.s32.totalorder %s12, 17
      %p137 = pnand %p135, %p136
      %p138 = pneg %p137
      // Predicated region
      $region25: #{tpu_custom_call.1} parent=5 // pred_check
        _
      $region26: #{tpu_custom_call.1} parent=5 // pred_check_branch
        %140 = sbr.rel (%p137) target = $region28
      $region27: #{tpu_custom_call.1} parent=5 // pred_region
        %s141 = ssub.s32 %s12, 1
        %s142 = sand.u32 %s25, 1
        %s143 = scalar_lea.sflag [#allocation3], %s142
        %s144 = sand.u32 %s25, 1
        %s145 = smul.addr %s144, 8
        %s146 = scalar_lea.vmem [#allocation2], %s145
        // Predicated region
        $region29: #{tpu_custom_call.1} parent=27 // pred_check
          %p147 = pneg %p38
        $region30: #{tpu_custom_call.1} parent=27 // pred_check_branch
          %149 = sbr.rel (%p147) target = $region32
        $region31: #{tpu_custom_call.1} parent=27 // pred_region
          %150 = dma.done %s143, 128
        $region32: #{tpu_custom_call.1} parent=27 // pred_fallthru
          _
        // Predicated region
        $region33: #{tpu_custom_call.1} parent=27 // pred_check
          %p151 = pneg %p59
        $region34: #{tpu_custom_call.1} parent=27 // pred_check_branch
          %153 = sbr.rel (%p151) target = $region36
        $region35: #{tpu_custom_call.1} parent=27 // pred_region
          %154 = dma.done [#allocation5], 3584
        $region36: #{tpu_custom_call.1} parent=27 // pred_fallthru
          _
        %s155 = sand.u32 %s25, 1
        %s156 = scalar_lea.sflag [#allocation3], %s155
        %s157 = sand.u32 %s25, 1
        %s158 = smul.addr %s157, 8
        %s159 = scalar_lea.vmem [#allocation2], %s158
        %p160 = pneg %p38
        %p161 = pneg %p35
        %p162 = pneg %p59
        %p163 = pneg %p56
        %p164 = pneg %p85
        %p165 = pneg %p82
        %p166 = scmp.lt.s32.totalorder %s17, 15
        %s167 = scalar_select %p166, %s17, 15
        %s168 = smul.addr %s167, 8
        %s169 = scalar_lea.vmem %s2, %s168
        %p170 = scmp.lt.s32.totalorder %s17, 15
        %s171 = scalar_select %p170, %s17, 15
        %s172 = smul.addr %s171, 8
        %s173 = scalar_lea.vmem %s2, %s172
        %v174 = vld [vmem:[%s146] sm:$0xff]
        %v175 = vld [vmem:[#allocation4] sm:$0xff]
        %v176 = vld [vmem:[#allocation4 + $0x8] sm:$0xff]
        %v177 = vld [vmem:[#allocation4 + $0x10] sm:$0x1]
        %v178 = vlaneseq
        %v179 = vshrl.u32 %v178, 7
        %v180 = vsub.s32 0, %v179
        %v181 = vrot.slane %v177, %v180
        %vm182 = vcmask 130048
        %v184 = vsel %vm182, %v174, 0
        %186 = vmatprep.subr.mxu0 0.0
        %187 = vmatpush1.msra.mxu0 0.0
        %188 = vmatprep.subr.mxu0 0.0
        %189 = vmatpush1.msra.mxu0 0.0
        %190 = vmatprep.subr.mxu0 0.0
        %191 = vmatpush1.msra.mxu0 0.0
        %192 = vmatprep.subr.mxu0 0.0
        %193 = vmatpush1.msra.mxu0 0.0
        %194 = vmatprep.subr.mxu0 0.0
        %195 = vmatpush1.msra.mxu0 0.0
        %196 = vmatprep.subr.mxu0 0.0
        %197 = vmatpush1.msra.mxu0 0.0
        %198 = vmatprep.subr.mxu0 0.0
        %199 = vmatpush1.msra.mxu0 0.0
        %200 = vmatprep.subr.mxu0 0.0
        %201 = vmatpush1.msra.mxu0 0.0
        %202 = vmatprep.subr.mxu0 0.0
        %203 = vmatpush1.msra.mxu0 0.0
        %204 = vmatprep.subr.mxu0 0.0
        %205 = vmatpush1.msra.mxu0 0.0
        %206 = vmatprep.subr.mxu0 0.0
        %207 = vmatpush1.msra.mxu0 0.0
        %208 = vmatprep.subr.mxu0 0.0
        %209 = vmatpush1.msra.mxu0 0.0
        %210 = vmatprep.subr.mxu0 0.0
        %211 = vmatpush1.msra.mxu0 0.0
        %212 = vmatprep.subr.mxu0 0.0
        %213 = vmatpush1.msra.mxu0 0.0
        %214 = vmatprep.subr.mxu0 0.0
        %215 = vmatpush1.msra.mxu0 %v176
        %216 = vmatprep.subr.mxu0 0.0
        %217 = vmatpush1.msra.mxu0 %v175
        %218 = vmatprep.subr.mxu0 0.0
        %219 = vmatpush2.msra.mxu0 0.0
        %220 = vmatprep.subr.mxu0 0.0
        %221 = vmatpush2.msra.mxu0 0.0
        %222 = vmatprep.subr.mxu0 0.0
        %223 = vmatpush2.msra.mxu0 0.0
        %224 = vmatprep.subr.mxu0 0.0
        %225 = vmatpush2.msra.mxu0 0.0
        %226 = vmatprep.subr.mxu0 0.0
        %227 = vmatpush2.msra.mxu0 0.0
        %228 = vmatprep.subr.mxu0 0.0
        %229 = vmatpush2.msra.mxu0 0.0
        %230 = vmatprep.subr.mxu0 0.0
        %231 = vmatpush2.msra.mxu0 0.0
        %232 = vmatprep.subr.mxu0 0.0
        %233 = vmatpush2.msra.mxu0 0.0
        %234 = vmatprep.subr.mxu0 0.0
        %235 = vmatpush2.msra.mxu0 0.0
        %236 = vmatprep.subr.mxu0 0.0
        %237 = vmatpush2.msra.mxu0 0.0
        %238 = vmatprep.subr.mxu0 0.0
        %239 = vmatpush2.msra.mxu0 0.0
        %240 = vmatprep.subr.mxu0 0.0
        %241 = vmatpush2.msra.mxu0 0.0
        %242 = vmatprep.subr.mxu0 0.0
        %243 = vmatpush2.msra.mxu0 0.0
        %244 = vmatprep.subr.mxu0 0.0
        %245 = vmatpush2.msra.mxu0 0.0
        %246 = vmatprep.subr.mxu0 0.0
        %247 = vmatpush2.msra.mxu0 0.0
        %248 = vmatprep.subr.mxu0 0.0
        %249 = vmatpush2.msra.mxu0 0.0
        %250 = vmatprep.mubr.f32.mxu0 0.0
        %251 = vmatmul.mubr.f32.gmra.mxu0 %v184
        %v252 = vpop.f32.mrf.mxu0
        %v253 = vadd.f32 %v181, %v252
        %v254 = vpop.f32.mrf.mxu0
        %255 = vdwg.mxu0
        %v256 = vmax.f32 %v253, 0.0
        %v257 = vld [vmem:[#allocation4 + $0x18] sm:$0xff]
        %v258 = vld [vmem:[#allocation4 + $0x20] sm:$0xff]
        %v259 = vld [vmem:[#allocation4 + $0x28] sm:$0xff]
        %v260 = vld [vmem:[#allocation4 + $0x30] sm:$0xff]
        %v261 = vld [vmem:[#allocation4 + $0x38] sm:$0x1]
        %v262 = vld [vmem:[#allocation4 + $0x40] sm:$0xff]
        %v263 = vld [vmem:[#allocation4 + $0x48] sm:$0xff]
        %v264 = vld [vmem:[#allocation4 + $0x50] sm:$0xff]
        %v265 = vld [vmem:[#allocation4 + $0x58] sm:$0xff]
        %v266 = vld [vmem:[#allocation4 + $0x60] sm:$0x1]
        %v267 = vlaneseq
        %v268 = vshrl.u32 %v267, 7
        %v269 = vsub.s32 0, %v268
        %v270 = vrot.slane %v261, %v269
        %vm271 = vcmask 261120
        %v273 = vsel %vm271, %v256, 0
        %275 = vmatprep.subr.mxu0 0.0
        %276 = vmatpush1.msra.mxu0 0.0
        %277 = vmatprep.subr.mxu0 0.0
        %278 = vmatpush1.msra.mxu0 0.0
        %279 = vmatprep.subr.mxu0 0.0
        %280 = vmatpush1.msra.mxu0 0.0
        %281 = vmatprep.subr.mxu0 0.0
        %282 = vmatpush1.msra.mxu0 0.0
        %283 = vmatprep.subr.mxu0 0.0
        %284 = vmatpush1.msra.mxu0 0.0
        %285 = vmatprep.subr.mxu0 0.0
        %286 = vmatpush1.msra.mxu0 0.0
        %287 = vmatprep.subr.mxu0 0.0
        %288 = vmatpush1.msra.mxu0 0.0
        %289 = vmatprep.subr.mxu0 0.0
        %290 = vmatpush1.msra.mxu0 0.0
        %291 = vmatprep.subr.mxu0 0.0
        %292 = vmatpush1.msra.mxu0 0.0
        %293 = vmatprep.subr.mxu0 0.0
        %294 = vmatpush1.msra.mxu0 0.0
        %295 = vmatprep.subr.mxu0 0.0
        %296 = vmatpush1.msra.mxu0 0.0
        %297 = vmatprep.subr.mxu0 0.0
        %298 = vmatpush1.msra.mxu0 0.0
        %299 = vmatprep.subr.mxu0 0.0
        %300 = vmatpush1.msra.mxu0 %v260
        %301 = vmatprep.subr.mxu0 0.0
        %302 = vmatpush1.msra.mxu0 %v259
        %303 = vmatprep.subr.mxu0 0.0
        %304 = vmatpush1.msra.mxu0 %v258
        %305 = vmatprep.subr.mxu0 0.0
        %306 = vmatpush1.msra.mxu0 %v257
        %307 = vmatprep.subr.mxu0 0.0
        %308 = vmatpush2.msra.mxu0 0.0
        %309 = vmatprep.subr.mxu0 0.0
        %310 = vmatpush2.msra.mxu0 0.0
        %311 = vmatprep.subr.mxu0 0.0
        %312 = vmatpush2.msra.mxu0 0.0
        %313 = vmatprep.subr.mxu0 0.0
        %314 = vmatpush2.msra.mxu0 0.0
        %315 = vmatprep.subr.mxu0 0.0
        %316 = vmatpush2.msra.mxu0 0.0
        %317 = vmatprep.subr.mxu0 0.0
        %318 = vmatpush2.msra.mxu0 0.0
        %319 = vmatprep.subr.mxu0 0.0
        %320 = vmatpush2.msra.mxu0 0.0
        %321 = vmatprep.subr.mxu0 0.0
        %322 = vmatpush2.msra.mxu0 0.0
        %323 = vmatprep.subr.mxu0 0.0
        %324 = vmatpush2.msra.mxu0 0.0
        %325 = vmatprep.subr.mxu0 0.0
        %326 = vmatpush2.msra.mxu0 0.0
        %327 = vmatprep.subr.mxu0 0.0
        %328 = vmatpush2.msra.mxu0 0.0
        %329 = vmatprep.subr.mxu0 0.0
        %330 = vmatpush2.msra.mxu0 0.0
        %331 = vmatprep.subr.mxu0 0.0
        %332 = vmatpush2.msra.mxu0 0.0
        %333 = vmatprep.subr.mxu0 0.0
        %334 = vmatpush2.msra.mxu0 0.0
        %335 = vmatprep.subr.mxu0 0.0
        %336 = vmatpush2.msra.mxu0 0.0
        %337 = vmatprep.subr.mxu0 0.0
        %338 = vmatpush2.msra.mxu0 0.0
        %339 = vmatprep.mubr.f32.mxu0 0.0
        %340 = vmatmul.mubr.f32.gmra.mxu0 %v273
        %v341 = vpop.f32.mrf.mxu0
        %v342 = vadd.f32 %v270, %v341
        %v343 = vpop.f32.mrf.mxu0
        %344 = vdwg.mxu0
        %346 = vrot.lane.b32.xlu0 %v342, 96
        %v347 = vpop.permute.xlu0 %346
        %v348 = vsel %vm271, %v342, 0
        %v350 = vsel %vm271, %v347, 0
        %352 = vmatprep.subr.mxu0 0.0
        %353 = vmatpush1.xpose.msra.mxu0 0.0
        %354 = vmatprep.subr.mxu0 0.0
        %355 = vmatpush1.xpose.msra.mxu0 0.0
        %356 = vmatprep.subr.mxu0 0.0
        %357 = vmatpush1.xpose.msra.mxu0 0.0
        %358 = vmatprep.subr.mxu0 0.0
        %359 = vmatpush1.xpose.msra.mxu0 0.0
        %360 = vmatprep.subr.mxu0 0.0
        %361 = vmatpush1.xpose.msra.mxu0 0.0
        %362 = vmatprep.subr.mxu0 0.0
        %363 = vmatpush1.xpose.msra.mxu0 0.0
        %364 = vmatprep.subr.mxu0 0.0
        %365 = vmatpush1.xpose.msra.mxu0 0.0
        %366 = vmatprep.subr.mxu0 0.0
        %367 = vmatpush1.xpose.msra.mxu0 0.0
        %368 = vmatprep.subr.mxu0 0.0
        %369 = vmatpush1.xpose.msra.mxu0 0.0
        %370 = vmatprep.subr.mxu0 0.0
        %371 = vmatpush1.xpose.msra.mxu0 0.0
        %372 = vmatprep.subr.mxu0 0.0
        %373 = vmatpush1.xpose.msra.mxu0 0.0
        %374 = vmatprep.subr.mxu0 0.0
        %375 = vmatpush1.xpose.msra.mxu0 0.0
        %376 = vmatprep.subr.mxu0 0.0
        %377 = vmatpush1.xpose.msra.mxu0 0.0
        %378 = vmatprep.subr.mxu0 0.0
        %379 = vmatpush1.xpose.msra.mxu0 0.0
        %380 = vmatprep.subr.mxu0 0.0
        %381 = vmatpush1.xpose.msra.mxu0 0.0
        %382 = vmatprep.subr.mxu0 0.0
        %383 = vmatpush1.xpose.msra.mxu0 %v350
        %384 = vmatprep.subr.mxu0 0.0
        %385 = vmatpush2.xpose.msra.mxu0 0.0
        %386 = vmatprep.subr.mxu0 0.0
        %387 = vmatpush2.xpose.msra.mxu0 0.0
        %388 = vmatprep.subr.mxu0 0.0
        %389 = vmatpush2.xpose.msra.mxu0 0.0
        %390 = vmatprep.subr.mxu0 0.0
        %391 = vmatpush2.xpose.msra.mxu0 0.0
        %392 = vmatprep.subr.mxu0 0.0
        %393 = vmatpush2.xpose.msra.mxu0 0.0
        %394 = vmatprep.subr.mxu0 0.0
        %395 = vmatpush2.xpose.msra.mxu0 0.0
        %396 = vmatprep.subr.mxu0 0.0
        %397 = vmatpush2.xpose.msra.mxu0 0.0
        %398 = vmatprep.subr.mxu0 0.0
        %399 = vmatpush2.xpose.msra.mxu0 0.0
        %400 = vmatprep.subr.mxu0 0.0
        %401 = vmatpush2.xpose.msra.mxu0 0.0
        %402 = vmatprep.subr.mxu0 0.0
        %403 = vmatpush2.xpose.msra.mxu0 0.0
        %404 = vmatprep.subr.mxu0 0.0
        %405 = vmatpush2.xpose.msra.mxu0 0.0
        %406 = vmatprep.subr.mxu0 0.0
        %407 = vmatpush2.xpose.msra.mxu0 0.0
        %408 = vmatprep.subr.mxu0 0.0
        %409 = vmatpush2.xpose.msra.mxu0 0.0
        %410 = vmatprep.subr.mxu0 0.0
        %411 = vmatpush2.xpose.msra.mxu0 0.0
        %412 = vmatprep.subr.mxu0 0.0
        %413 = vmatpush2.xpose.msra.mxu0 0.0
        %414 = vmatprep.subr.mxu0 0.0
        %415 = vmatpush2.xpose.msra.mxu0 0.0
        %416 = vmatprep.mubr.f32.mxu0 0.0
        %417 = vmatmul.mubr.f32.gmra.mxu0 %v348
        %v418 = vpop.f32.mrf.mxu0
        %v419 = vadd.f32 0.0, %v418
        %v420 = vpop.f32.mrf.mxu0
        %421 = vdwg.mxu0
        %vm422 = vcmask 64512
        %v423 = vsel %vm422, %v419, -inf
        %424 = vmax.xlane.f32.xlu0 %v423
        %v425 = vpop.xlane.xlu0 %424
        %v426 = vsub.f32 %v419, %v425
        %v427 = vmul.f32 %v426, 1.442695
        %v428 = vpow.pop %v427
        %v429 = vsel %vm422, %v428, 0.0
        %430 = vadd.xlane.f32.xlu0 %v429
        %v431 = vpop.xlane.xlu0 %430
        %v432 = vrcp.pop %v431
        %v433 = vmul.f32 %v428, %v432
        %434 = vrot.lane.b32.xlu0 %v342, 64
        %v435 = vpop.permute.xlu0 %434
        %v438 = vsel %vm422, %v433, 0
        %440 = vmatprep.subr.mxu0 0.0
        %441 = vmatpush1.msra.mxu0 0.0
        %442 = vmatprep.subr.mxu0 0.0
        %443 = vmatpush1.msra.mxu0 0.0
        %444 = vmatprep.subr.mxu0 0.0
        %445 = vmatpush1.msra.mxu0 0.0
        %446 = vmatprep.subr.mxu0 0.0
        %447 = vmatpush1.msra.mxu0 0.0
        %448 = vmatprep.subr.mxu0 0.0
        %449 = vmatpush1.msra.mxu0 0.0
        %450 = vmatprep.subr.mxu0 0.0
        %451 = vmatpush1.msra.mxu0 0.0
        %452 = vmatprep.subr.mxu0 0.0
        %453 = vmatpush1.msra.mxu0 0.0
        %454 = vmatprep.subr.mxu0 0.0
        %455 = vmatpush1.msra.mxu0 0.0
        %456 = vmatprep.subr.mxu0 0.0
        %457 = vmatpush1.msra.mxu0 0.0
        %458 = vmatprep.subr.mxu0 0.0
        %459 = vmatpush1.msra.mxu0 0.0
        %460 = vmatprep.subr.mxu0 0.0
        %461 = vmatpush1.msra.mxu0 0.0
        %462 = vmatprep.subr.mxu0 0.0
        %463 = vmatpush1.msra.mxu0 0.0
        %464 = vmatprep.subr.mxu0 0.0
        %465 = vmatpush1.msra.mxu0 0.0
        %466 = vmatprep.subr.mxu0 0.0
        %467 = vmatpush1.msra.mxu0 0.0
        %468 = vmatprep.subr.mxu0 0.0
        %469 = vmatpush1.msra.mxu0 0.0
        %470 = vmatprep.subr.mxu0 0.0
        %471 = vmatpush1.msra.mxu0 %v435
        %472 = vmatprep.subr.mxu0 0.0
        %473 = vmatpush2.msra.mxu0 0.0
        %474 = vmatprep.subr.mxu0 0.0
        %475 = vmatpush2.msra.mxu0 0.0
        %476 = vmatprep.subr.mxu0 0.0
        %477 = vmatpush2.msra.mxu0 0.0
        %478 = vmatprep.subr.mxu0 0.0
        %479 = vmatpush2.msra.mxu0 0.0
        %480 = vmatprep.subr.mxu0 0.0
        %481 = vmatpush2.msra.mxu0 0.0
        %482 = vmatprep.subr.mxu0 0.0
        %483 = vmatpush2.msra.mxu0 0.0
        %484 = vmatprep.subr.mxu0 0.0
        %485 = vmatpush2.msra.mxu0 0.0
        %486 = vmatprep.subr.mxu0 0.0
        %487 = vmatpush2.msra.mxu0 0.0
        %488 = vmatprep.subr.mxu0 0.0
        %489 = vmatpush2.msra.mxu0 0.0
        %490 = vmatprep.subr.mxu0 0.0
        %491 = vmatpush2.msra.mxu0 0.0
        %492 = vmatprep.subr.mxu0 0.0
        %493 = vmatpush2.msra.mxu0 0.0
        %494 = vmatprep.subr.mxu0 0.0
        %495 = vmatpush2.msra.mxu0 0.0
        %496 = vmatprep.subr.mxu0 0.0
        %497 = vmatpush2.msra.mxu0 0.0
        %498 = vmatprep.subr.mxu0 0.0
        %499 = vmatpush2.msra.mxu0 0.0
        %500 = vmatprep.subr.mxu0 0.0
        %501 = vmatpush2.msra.mxu0 0.0
        %502 = vmatprep.subr.mxu0 0.0
        %503 = vmatpush2.msra.mxu0 0.0
        %504 = vmatprep.mubr.f32.mxu0 0.0
        %505 = vmatmul.mubr.f32.gmra.mxu0 %v438
        %v506 = vpop.f32.mrf.mxu0
        %v507 = vadd.f32 0.0, %v506
        %v508 = vpop.f32.mrf.mxu0
        %509 = vdwg.mxu0
        %v510 = vlaneseq
        %v511 = vshrl.u32 %v510, 7
        %v512 = vsub.s32 0, %v511
        %v513 = vrot.slane %v266, %v512
        %v515 = vsel %vm271, %v507, 0
        %517 = vmatprep.subr.mxu0 0.0
        %518 = vmatpush1.msra.mxu0 0.0
        %519 = vmatprep.subr.mxu0 0.0
        %520 = vmatpush1.msra.mxu0 0.0
        %521 = vmatprep.subr.mxu0 0.0
        %522 = vmatpush1.msra.mxu0 0.0
        %523 = vmatprep.subr.mxu0 0.0
        %524 = vmatpush1.msra.mxu0 0.0
        %525 = vmatprep.subr.mxu0 0.0
        %526 = vmatpush1.msra.mxu0 0.0
        %527 = vmatprep.subr.mxu0 0.0
        %528 = vmatpush1.msra.mxu0 0.0
        %529 = vmatprep.subr.mxu0 0.0
        %530 = vmatpush1.msra.mxu0 0.0
        %531 = vmatprep.subr.mxu0 0.0
        %532 = vmatpush1.msra.mxu0 0.0
        %533 = vmatprep.subr.mxu0 0.0
        %534 = vmatpush1.msra.mxu0 0.0
        %535 = vmatprep.subr.mxu0 0.0
        %536 = vmatpush1.msra.mxu0 0.0
        %537 = vmatprep.subr.mxu0 0.0
        %538 = vmatpush1.msra.mxu0 0.0
        %539 = vmatprep.subr.mxu0 0.0
        %540 = vmatpush1.msra.mxu0 0.0
        %541 = vmatprep.subr.mxu0 0.0
        %542 = vmatpush1.msra.mxu0 %v265
        %543 = vmatprep.subr.mxu0 0.0
        %544 = vmatpush1.msra.mxu0 %v264
        %545 = vmatprep.subr.mxu0 0.0
        %546 = vmatpush1.msra.mxu0 %v263
        %547 = vmatprep.subr.mxu0 0.0
        %548 = vmatpush1.msra.mxu0 %v262
        %549 = vmatprep.subr.mxu0 0.0
        %550 = vmatpush2.msra.mxu0 0.0
        %551 = vmatprep.subr.mxu0 0.0
        %552 = vmatpush2.msra.mxu0 0.0
        %553 = vmatprep.subr.mxu0 0.0
        %554 = vmatpush2.msra.mxu0 0.0
        %555 = vmatprep.subr.mxu0 0.0
        %556 = vmatpush2.msra.mxu0 0.0
        %557 = vmatprep.subr.mxu0 0.0
        %558 = vmatpush2.msra.mxu0 0.0
        %559 = vmatprep.subr.mxu0 0.0
        %560 = vmatpush2.msra.mxu0 0.0
        %561 = vmatprep.subr.mxu0 0.0
        %562 = vmatpush2.msra.mxu0 0.0
        %563 = vmatprep.subr.mxu0 0.0
        %564 = vmatpush2.msra.mxu0 0.0
        %565 = vmatprep.subr.mxu0 0.0
        %566 = vmatpush2.msra.mxu0 0.0
        %567 = vmatprep.subr.mxu0 0.0
        %568 = vmatpush2.msra.mxu0 0.0
        %569 = vmatprep.subr.mxu0 0.0
        %570 = vmatpush2.msra.mxu0 0.0
        %571 = vmatprep.subr.mxu0 0.0
        %572 = vmatpush2.msra.mxu0 0.0
        %573 = vmatprep.subr.mxu0 0.0
        %574 = vmatpush2.msra.mxu0 0.0
        %575 = vmatprep.subr.mxu0 0.0
        %576 = vmatpush2.msra.mxu0 0.0
        %577 = vmatprep.subr.mxu0 0.0
        %578 = vmatpush2.msra.mxu0 0.0
        %579 = vmatprep.subr.mxu0 0.0
        %580 = vmatpush2.msra.mxu0 0.0
        %581 = vmatprep.mubr.f32.mxu0 0.0
        %582 = vmatmul.mubr.f32.gmra.mxu0 %v515
        %v583 = vpop.f32.mrf.mxu0
        %v584 = vadd.f32 %v513, %v583
        %v585 = vpop.f32.mrf.mxu0
        %586 = vdwg.mxu0
        %v587 = vmax.f32 %v584, 0.0
        %v588 = vadd.f32 %v256, %v587
        %v589 = vld [vmem:[#allocation4 + $0x68] sm:$0xff]
        %v590 = vld [vmem:[#allocation4 + $0x70] sm:$0xff]
        %v591 = vld [vmem:[#allocation4 + $0x78] sm:$0xff]
        %v592 = vld [vmem:[#allocation4 + $0x80] sm:$0xff]
        %v593 = vld [vmem:[#allocation4 + $0x88] sm:$0x1]
        %v594 = vld [vmem:[#allocation4 + $0x90] sm:$0xff]
        %v595 = vld [vmem:[#allocation4 + $0x98] sm:$0xff]
        %v596 = vld [vmem:[#allocation4 + $0xa0] sm:$0xff]
        %v597 = vld [vmem:[#allocation4 + $0xa8] sm:$0xff]
        %v598 = vld [vmem:[#allocation4 + $0xb0] sm:$0x1]
        %v599 = vlaneseq
        %v600 = vshrl.u32 %v599, 7
        %v601 = vsub.s32 0, %v600
        %v602 = vrot.slane %v593, %v601
        %v604 = vsel %vm271, %v588, 0
        %606 = vmatprep.subr.mxu0 0.0
        %607 = vmatpush1.msra.mxu0 0.0
        %608 = vmatprep.subr.mxu0 0.0
        %609 = vmatpush1.msra.mxu0 0.0
        %610 = vmatprep.subr.mxu0 0.0
        %611 = vmatpush1.msra.mxu0 0.0
        %612 = vmatprep.subr.mxu0 0.0
        %613 = vmatpush1.msra.mxu0 0.0
        %614 = vmatprep.subr.mxu0 0.0
        %615 = vmatpush1.msra.mxu0 0.0
        %616 = vmatprep.subr.mxu0 0.0
        %617 = vmatpush1.msra.mxu0 0.0
        %618 = vmatprep.subr.mxu0 0.0
        %619 = vmatpush1.msra.mxu0 0.0
        %620 = vmatprep.subr.mxu0 0.0
        %621 = vmatpush1.msra.mxu0 0.0
        %622 = vmatprep.subr.mxu0 0.0
        %623 = vmatpush1.msra.mxu0 0.0
        %624 = vmatprep.subr.mxu0 0.0
        %625 = vmatpush1.msra.mxu0 0.0
        %626 = vmatprep.subr.mxu0 0.0
        %627 = vmatpush1.msra.mxu0 0.0
        %628 = vmatprep.subr.mxu0 0.0
        %629 = vmatpush1.msra.mxu0 0.0
        %630 = vmatprep.subr.mxu0 0.0
        %631 = vmatpush1.msra.mxu0 %v592
        %632 = vmatprep.subr.mxu0 0.0
        %633 = vmatpush1.msra.mxu0 %v591
        %634 = vmatprep.subr.mxu0 0.0
        %635 = vmatpush1.msra.mxu0 %v590
        %636 = vmatprep.subr.mxu0 0.0
        %637 = vmatpush1.msra.mxu0 %v589
        %638 = vmatprep.subr.mxu0 0.0
        %639 = vmatpush2.msra.mxu0 0.0
        %640 = vmatprep.subr.mxu0 0.0
        %641 = vmatpush2.msra.mxu0 0.0
        %642 = vmatprep.subr.mxu0 0.0
        %643 = vmatpush2.msra.mxu0 0.0
        %644 = vmatprep.subr.mxu0 0.0
        %645 = vmatpush2.msra.mxu0 0.0
        %646 = vmatprep.subr.mxu0 0.0
        %647 = vmatpush2.msra.mxu0 0.0
        %648 = vmatprep.subr.mxu0 0.0
        %649 = vmatpush2.msra.mxu0 0.0
        %650 = vmatprep.subr.mxu0 0.0
        %651 = vmatpush2.msra.mxu0 0.0
        %652 = vmatprep.subr.mxu0 0.0
        %653 = vmatpush2.msra.mxu0 0.0
        %654 = vmatprep.subr.mxu0 0.0
        %655 = vmatpush2.msra.mxu0 0.0
        %656 = vmatprep.subr.mxu0 0.0
        %657 = vmatpush2.msra.mxu0 0.0
        %658 = vmatprep.subr.mxu0 0.0
        %659 = vmatpush2.msra.mxu0 0.0
        %660 = vmatprep.subr.mxu0 0.0
        %661 = vmatpush2.msra.mxu0 0.0
        %662 = vmatprep.subr.mxu0 0.0
        %663 = vmatpush2.msra.mxu0 0.0
        %664 = vmatprep.subr.mxu0 0.0
        %665 = vmatpush2.msra.mxu0 0.0
        %666 = vmatprep.subr.mxu0 0.0
        %667 = vmatpush2.msra.mxu0 0.0
        %668 = vmatprep.subr.mxu0 0.0
        %669 = vmatpush2.msra.mxu0 0.0
        %670 = vmatprep.mubr.f32.mxu0 0.0
        %671 = vmatmul.mubr.f32.gmra.mxu0 %v604
        %v672 = vpop.f32.mrf.mxu0
        %v673 = vadd.f32 %v602, %v672
        %v674 = vpop.f32.mrf.mxu0
        %675 = vdwg.mxu0
        %677 = vrot.lane.b32.xlu0 %v673, 96
        %v678 = vpop.permute.xlu0 %677
        %v679 = vsel %vm271, %v673, 0
        %v681 = vsel %vm271, %v678, 0
        %683 = vmatprep.subr.mxu0 0.0
        %684 = vmatpush1.xpose.msra.mxu0 0.0
        %685 = vmatprep.subr.mxu0 0.0
        %686 = vmatpush1.xpose.msra.mxu0 0.0
        %687 = vmatprep.subr.mxu0 0.0
        %688 = vmatpush1.xpose.msra.mxu0 0.0
        %689 = vmatprep.subr.mxu0 0.0
        %690 = vmatpush1.xpose.msra.mxu0 0.0
        %691 = vmatprep.subr.mxu0 0.0
        %692 = vmatpush1.xpose.msra.mxu0 0.0
        %693 = vmatprep.subr.mxu0 0.0
        %694 = vmatpush1.xpose.msra.mxu0 0.0
        %695 = vmatprep.subr.mxu0 0.0
        %696 = vmatpush1.xpose.msra.mxu0 0.0
        %697 = vmatprep.subr.mxu0 0.0
        %698 = vmatpush1.xpose.msra.mxu0 0.0
        %699 = vmatprep.subr.mxu0 0.0
        %700 = vmatpush1.xpose.msra.mxu0 0.0
        %701 = vmatprep.subr.mxu0 0.0
        %702 = vmatpush1.xpose.msra.mxu0 0.0
        %703 = vmatprep.subr.mxu0 0.0
        %704 = vmatpush1.xpose.msra.mxu0 0.0
        %705 = vmatprep.subr.mxu0 0.0
        %706 = vmatpush1.xpose.msra.mxu0 0.0
        %707 = vmatprep.subr.mxu0 0.0
        %708 = vmatpush1.xpose.msra.mxu0 0.0
        %709 = vmatprep.subr.mxu0 0.0
        %710 = vmatpush1.xpose.msra.mxu0 0.0
        %711 = vmatprep.subr.mxu0 0.0
        %712 = vmatpush1.xpose.msra.mxu0 0.0
        %713 = vmatprep.subr.mxu0 0.0
        %714 = vmatpush1.xpose.msra.mxu0 %v681
        %715 = vmatprep.subr.mxu0 0.0
        %716 = vmatpush2.xpose.msra.mxu0 0.0
        %717 = vmatprep.subr.mxu0 0.0
        %718 = vmatpush2.xpose.msra.mxu0 0.0
        %719 = vmatprep.subr.mxu0 0.0
        %720 = vmatpush2.xpose.msra.mxu0 0.0
        %721 = vmatprep.subr.mxu0 0.0
        %722 = vmatpush2.xpose.msra.mxu0 0.0
        %723 = vmatprep.subr.mxu0 0.0
        %724 = vmatpush2.xpose.msra.mxu0 0.0
        %725 = vmatprep.subr.mxu0 0.0
        %726 = vmatpush2.xpose.msra.mxu0 0.0
        %727 = vmatprep.subr.mxu0 0.0
        %728 = vmatpush2.xpose.msra.mxu0 0.0
        %729 = vmatprep.subr.mxu0 0.0
        %730 = vmatpush2.xpose.msra.mxu0 0.0
        %731 = vmatprep.subr.mxu0 0.0
        %732 = vmatpush2.xpose.msra.mxu0 0.0
        %733 = vmatprep.subr.mxu0 0.0
        %734 = vmatpush2.xpose.msra.mxu0 0.0
        %735 = vmatprep.subr.mxu0 0.0
        %736 = vmatpush2.xpose.msra.mxu0 0.0
        %737 = vmatprep.subr.mxu0 0.0
        %738 = vmatpush2.xpose.msra.mxu0 0.0
        %739 = vmatprep.subr.mxu0 0.0
        %740 = vmatpush2.xpose.msra.mxu0 0.0
        %741 = vmatprep.subr.mxu0 0.0
        %742 = vmatpush2.xpose.msra.mxu0 0.0
        %743 = vmatprep.subr.mxu0 0.0
        %744 = vmatpush2.xpose.msra.mxu0 0.0
        %745 = vmatprep.subr.mxu0 0.0
        %746 = vmatpush2.xpose.msra.mxu0 0.0
        %747 = vmatprep.mubr.f32.mxu0 0.0
        %748 = vmatmul.mubr.f32.gmra.mxu0 %v679
        %v749 = vpop.f32.mrf.mxu0
        %v750 = vadd.f32 0.0, %v749
        %v751 = vpop.f32.mrf.mxu0
        %752 = vdwg.mxu0
        %v753 = vsel %vm422, %v750, -inf
        %754 = vmax.xlane.f32.xlu0 %v753
        %v755 = vpop.xlane.xlu0 %754
        %v756 = vsub.f32 %v750, %v755
        %v757 = vmul.f32 %v756, 1.442695
        %v758 = vpow.pop %v757
        %v759 = vsel %vm422, %v758, 0.0
        %760 = vadd.xlane.f32.xlu0 %v759
        %v761 = vpop.xlane.xlu0 %760
        %v762 = vrcp.pop %v761
        %v763 = vmul.f32 %v758, %v762
        %764 = vrot.lane.b32.xlu0 %v673, 64
        %v765 = vpop.permute.xlu0 %764
        %v768 = vsel %vm422, %v763, 0
        %770 = vmatprep.subr.mxu0 0.0
        %771 = vmatpush1.msra.mxu0 0.0
        %772 = vmatprep.subr.mxu0 0.0
        %773 = vmatpush1.msra.mxu0 0.0
        %774 = vmatprep.subr.mxu0 0.0
        %775 = vmatpush1.msra.mxu0 0.0
        %776 = vmatprep.subr.mxu0 0.0
        %777 = vmatpush1.msra.mxu0 0.0
        %778 = vmatprep.subr.mxu0 0.0
        %779 = vmatpush1.msra.mxu0 0.0
        %780 = vmatprep.subr.mxu0 0.0
        %781 = vmatpush1.msra.mxu0 0.0
        %782 = vmatprep.subr.mxu0 0.0
        %783 = vmatpush1.msra.mxu0 0.0
        %784 = vmatprep.subr.mxu0 0.0
        %785 = vmatpush1.msra.mxu0 0.0
        %786 = vmatprep.subr.mxu0 0.0
        %787 = vmatpush1.msra.mxu0 0.0
        %788 = vmatprep.subr.mxu0 0.0
        %789 = vmatpush1.msra.mxu0 0.0
        %790 = vmatprep.subr.mxu0 0.0
        %791 = vmatpush1.msra.mxu0 0.0
        %792 = vmatprep.subr.mxu0 0.0
        %793 = vmatpush1.msra.mxu0 0.0
        %794 = vmatprep.subr.mxu0 0.0
        %795 = vmatpush1.msra.mxu0 0.0
        %796 = vmatprep.subr.mxu0 0.0
        %797 = vmatpush1.msra.mxu0 0.0
        %798 = vmatprep.subr.mxu0 0.0
        %799 = vmatpush1.msra.mxu0 0.0
        %800 = vmatprep.subr.mxu0 0.0
        %801 = vmatpush1.msra.mxu0 %v765
        %802 = vmatprep.subr.mxu0 0.0
        %803 = vmatpush2.msra.mxu0 0.0
        %804 = vmatprep.subr.mxu0 0.0
        %805 = vmatpush2.msra.mxu0 0.0
        %806 = vmatprep.subr.mxu0 0.0
        %807 = vmatpush2.msra.mxu0 0.0
        %808 = vmatprep.subr.mxu0 0.0
        %809 = vmatpush2.msra.mxu0 0.0
        %810 = vmatprep.subr.mxu0 0.0
        %811 = vmatpush2.msra.mxu0 0.0
        %812 = vmatprep.subr.mxu0 0.0
        %813 = vmatpush2.msra.mxu0 0.0
        %814 = vmatprep.subr.mxu0 0.0
        %815 = vmatpush2.msra.mxu0 0.0
        %816 = vmatprep.subr.mxu0 0.0
        %817 = vmatpush2.msra.mxu0 0.0
        %818 = vmatprep.subr.mxu0 0.0
        %819 = vmatpush2.msra.mxu0 0.0
        %820 = vmatprep.subr.mxu0 0.0
        %821 = vmatpush2.msra.mxu0 0.0
        %822 = vmatprep.subr.mxu0 0.0
        %823 = vmatpush2.msra.mxu0 0.0
        %824 = vmatprep.subr.mxu0 0.0
        %825 = vmatpush2.msra.mxu0 0.0
        %826 = vmatprep.subr.mxu0 0.0
        %827 = vmatpush2.msra.mxu0 0.0
        %828 = vmatprep.subr.mxu0 0.0
        %829 = vmatpush2.msra.mxu0 0.0
        %830 = vmatprep.subr.mxu0 0.0
        %831 = vmatpush2.msra.mxu0 0.0
        %832 = vmatprep.subr.mxu0 0.0
        %833 = vmatpush2.msra.mxu0 0.0
        %834 = vmatprep.mubr.f32.mxu0 0.0
        %835 = vmatmul.mubr.f32.gmra.mxu0 %v768
        %v836 = vpop.f32.mrf.mxu0
        %v837 = vadd.f32 0.0, %v836
        %v838 = vpop.f32.mrf.mxu0
        %839 = vdwg.mxu0
        %v840 = vlaneseq
        %v841 = vshrl.u32 %v840, 7
        %v842 = vsub.s32 0, %v841
        %v843 = vrot.slane %v598, %v842
        %v845 = vsel %vm271, %v837, 0
        %847 = vmatprep.subr.mxu0 0.0
        %848 = vmatpush1.msra.mxu0 0.0
        %849 = vmatprep.subr.mxu0 0.0
        %850 = vmatpush1.msra.mxu0 0.0
        %851 = vmatprep.subr.mxu0 0.0
        %852 = vmatpush1.msra.mxu0 0.0
        %853 = vmatprep.subr.mxu0 0.0
        %854 = vmatpush1.msra.mxu0 0.0
        %855 = vmatprep.subr.mxu0 0.0
        %856 = vmatpush1.msra.mxu0 0.0
        %857 = vmatprep.subr.mxu0 0.0
        %858 = vmatpush1.msra.mxu0 0.0
        %859 = vmatprep.subr.mxu0 0.0
        %860 = vmatpush1.msra.mxu0 0.0
        %861 = vmatprep.subr.mxu0 0.0
        %862 = vmatpush1.msra.mxu0 0.0
        %863 = vmatprep.subr.mxu0 0.0
        %864 = vmatpush1.msra.mxu0 0.0
        %865 = vmatprep.subr.mxu0 0.0
        %866 = vmatpush1.msra.mxu0 0.0
        %867 = vmatprep.subr.mxu0 0.0
        %868 = vmatpush1.msra.mxu0 0.0
        %869 = vmatprep.subr.mxu0 0.0
        %870 = vmatpush1.msra.mxu0 0.0
        %871 = vmatprep.subr.mxu0 0.0
        %872 = vmatpush1.msra.mxu0 %v597
        %873 = vmatprep.subr.mxu0 0.0
        %874 = vmatpush1.msra.mxu0 %v596
        %875 = vmatprep.subr.mxu0 0.0
        %876 = vmatpush1.msra.mxu0 %v595
        %877 = vmatprep.subr.mxu0 0.0
        %878 = vmatpush1.msra.mxu0 %v594
        %879 = vmatprep.subr.mxu0 0.0
        %880 = vmatpush2.msra.mxu0 0.0
        %881 = vmatprep.subr.mxu0 0.0
        %882 = vmatpush2.msra.mxu0 0.0
        %883 = vmatprep.subr.mxu0 0.0
        %884 = vmatpush2.msra.mxu0 0.0
        %885 = vmatprep.subr.mxu0 0.0
        %886 = vmatpush2.msra.mxu0 0.0
        %887 = vmatprep.subr.mxu0 0.0
        %888 = vmatpush2.msra.mxu0 0.0
        %889 = vmatprep.subr.mxu0 0.0
        %890 = vmatpush2.msra.mxu0 0.0
        %891 = vmatprep.subr.mxu0 0.0
        %892 = vmatpush2.msra.mxu0 0.0
        %893 = vmatprep.subr.mxu0 0.0
        %894 = vmatpush2.msra.mxu0 0.0
        %895 = vmatprep.subr.mxu0 0.0
        %896 = vmatpush2.msra.mxu0 0.0
        %897 = vmatprep.subr.mxu0 0.0
        %898 = vmatpush2.msra.mxu0 0.0
        %899 = vmatprep.subr.mxu0 0.0
        %900 = vmatpush2.msra.mxu0 0.0
        %901 = vmatprep.subr.mxu0 0.0
        %902 = vmatpush2.msra.mxu0 0.0
        %903 = vmatprep.subr.mxu0 0.0
        %904 = vmatpush2.msra.mxu0 0.0
        %905 = vmatprep.subr.mxu0 0.0
        %906 = vmatpush2.msra.mxu0 0.0
        %907 = vmatprep.subr.mxu0 0.0
        %908 = vmatpush2.msra.mxu0 0.0
        %909 = vmatprep.subr.mxu0 0.0
        %910 = vmatpush2.msra.mxu0 0.0
        %911 = vmatprep.mubr.f32.mxu0 0.0
        %912 = vmatmul.mubr.f32.gmra.mxu0 %v845
        %v913 = vpop.f32.mrf.mxu0
        %v914 = vadd.f32 %v843, %v913
        %v915 = vpop.f32.mrf.mxu0
        %916 = vdwg.mxu0
        %v917 = vmax.f32 %v914, 0.0
        %v918 = vadd.f32 %v588, %v917
        %v919 = vmax.f32 %v918, 0.0
        %v920 = vld [vmem:[#allocation4 + $0xb8] sm:$0xff]
        %v921 = vld [vmem:[#allocation4 + $0xc0] sm:$0xff]
        %v922 = vld [vmem:[#allocation4 + $0xc8] sm:$0xff]
        %v923 = vld [vmem:[#allocation4 + $0xd0] sm:$0xff]
        %v924 = vld [vmem:[#allocation4 + $0xd8] sm:$0x1]
        %v925 = vlaneseq
        %v926 = vshrl.u32 %v925, 7
        %v927 = vsub.s32 0, %v926
        %v928 = vrot.slane %v924, %v927
        %v930 = vsel %vm271, %v919, 0
        %932 = vmatprep.subr.mxu0 0.0
        %933 = vmatpush1.msra.mxu0 0.0
        %934 = vmatprep.subr.mxu0 0.0
        %935 = vmatpush1.msra.mxu0 0.0
        %936 = vmatprep.subr.mxu0 0.0
        %937 = vmatpush1.msra.mxu0 0.0
        %938 = vmatprep.subr.mxu0 0.0
        %939 = vmatpush1.msra.mxu0 0.0
        %940 = vmatprep.subr.mxu0 0.0
        %941 = vmatpush1.msra.mxu0 0.0
        %942 = vmatprep.subr.mxu0 0.0
        %943 = vmatpush1.msra.mxu0 0.0
        %944 = vmatprep.subr.mxu0 0.0
        %945 = vmatpush1.msra.mxu0 0.0
        %946 = vmatprep.subr.mxu0 0.0
        %947 = vmatpush1.msra.mxu0 0.0
        %948 = vmatprep.subr.mxu0 0.0
        %949 = vmatpush1.msra.mxu0 0.0
        %950 = vmatprep.subr.mxu0 0.0
        %951 = vmatpush1.msra.mxu0 0.0
        %952 = vmatprep.subr.mxu0 0.0
        %953 = vmatpush1.msra.mxu0 0.0
        %954 = vmatprep.subr.mxu0 0.0
        %955 = vmatpush1.msra.mxu0 0.0
        %956 = vmatprep.subr.mxu0 0.0
        %957 = vmatpush1.msra.mxu0 %v923
        %958 = vmatprep.subr.mxu0 0.0
        %959 = vmatpush1.msra.mxu0 %v922
        %960 = vmatprep.subr.mxu0 0.0
        %961 = vmatpush1.msra.mxu0 %v921
        %962 = vmatprep.subr.mxu0 0.0
        %963 = vmatpush1.msra.mxu0 %v920
        %964 = vmatprep.subr.mxu0 0.0
        %965 = vmatpush2.msra.mxu0 0.0
        %966 = vmatprep.subr.mxu0 0.0
        %967 = vmatpush2.msra.mxu0 0.0
        %968 = vmatprep.subr.mxu0 0.0
        %969 = vmatpush2.msra.mxu0 0.0
        %970 = vmatprep.subr.mxu0 0.0
        %971 = vmatpush2.msra.mxu0 0.0
        %972 = vmatprep.subr.mxu0 0.0
        %973 = vmatpush2.msra.mxu0 0.0
        %974 = vmatprep.subr.mxu0 0.0
        %975 = vmatpush2.msra.mxu0 0.0
        %976 = vmatprep.subr.mxu0 0.0
        %977 = vmatpush2.msra.mxu0 0.0
        %978 = vmatprep.subr.mxu0 0.0
        %979 = vmatpush2.msra.mxu0 0.0
        %980 = vmatprep.subr.mxu0 0.0
        %981 = vmatpush2.msra.mxu0 0.0
        %982 = vmatprep.subr.mxu0 0.0
        %983 = vmatpush2.msra.mxu0 0.0
        %984 = vmatprep.subr.mxu0 0.0
        %985 = vmatpush2.msra.mxu0 0.0
        %986 = vmatprep.subr.mxu0 0.0
        %987 = vmatpush2.msra.mxu0 0.0
        %988 = vmatprep.subr.mxu0 0.0
        %989 = vmatpush2.msra.mxu0 0.0
        %990 = vmatprep.subr.mxu0 0.0
        %991 = vmatpush2.msra.mxu0 0.0
        %992 = vmatprep.subr.mxu0 0.0
        %993 = vmatpush2.msra.mxu0 0.0
        %994 = vmatprep.subr.mxu0 0.0
        %995 = vmatpush2.msra.mxu0 0.0
        %996 = vmatprep.mubr.f32.mxu0 0.0
        %997 = vmatmul.mubr.f32.gmra.mxu0 %v930
        %v998 = vpop.f32.mrf.mxu0
        %v999 = vadd.f32 %v928, %v998
        %v1000 = vpop.f32.mrf.mxu0
        %1001 = vdwg.mxu0
        %1002 = vst.msk [vmem:[%s173] sm:$0xff] %vm422, %v999
        %p1003 = scmp.lt.s32.totalorder %s17, 15
        %s1004 = scalar_select %p1003, %s17, 15
        %s1005 = smul.addr %s1004, 8
        %s1006 = scalar_lea.vmem %s2, %s1005
        // Predicated region
        $region37: #{tpu_custom_call.1} parent=27 // pred_check
          %p1007 = pneg %p82
        $region38: #{tpu_custom_call.1} parent=27 // pred_check_branch
          %1009 = sbr.rel (%p1007) target = $region40
        $region39: #{tpu_custom_call.1} parent=27 // pred_region
          _
        $region40: #{tpu_custom_call.1} parent=27 // pred_fallthru
          _
      $region28: #{tpu_custom_call.1} parent=5 // pred_fallthru
        _
      %p1010 = scmp.le.s32.totalorder 2, %s12
      // Predicated region
      $region41: #{tpu_custom_call.1} parent=5 // pred_check
        %p1011 = pneg %p1010
      $region42: #{tpu_custom_call.1} parent=5 // pred_check_branch
        %1013 = sbr.rel (%p1011) target = $region44
      $region43: #{tpu_custom_call.1} parent=5 // pred_region
        %s1014 = ssub.s32 %s12, 2
        // Predicated region
        $region45: #{tpu_custom_call.1} parent=43 // pred_check
          %p1015 = pneg %p88
        $region46: #{tpu_custom_call.1} parent=43 // pred_check_branch
          %1017 = sbr.rel (%p1015) target = $region48
        $region47: #{tpu_custom_call.1} parent=43 // pred_region
          %p1018 = scmp.lt.s32.totalorder %s18, 15
          %s1019 = scalar_select %p1018, %s18, 15
          %s1020 = smul.addr %s1019, 8
          %s1021 = scalar_lea.vmem %s2, %s1020
        $region48: #{tpu_custom_call.1} parent=43 // pred_fallthru
          _
      $region44: #{tpu_custom_call.1} parent=5 // pred_fallthru
        _
    $region6: #{tpu_custom_call.1} parent=1 // loop_footer
      %s16 = sadd.s32 1, %s12
    $region7: #{tpu_custom_call.1} parent=1 // loop_footer_branch
      %11 = sbr.rel target = $region3
    $region8: #{tpu_custom_call.1} parent=1 // loop_exit
      _
    %1022 = vsyncpa [#allocation3], 1
    %s1023 = scalar_lea.sflag [#allocation3], 1
    %1024 = vsyncpa %s1023, 1
    %1025 = vsyncpa [#allocation5], 1

</llo_original>
